<compile_context>
chip_gen: v7x
topology: tpu7x:2x2x1
jax: 0.10.0
libtpu: 0.0.40
codegen_flags: <defaults>
</compile_context>

<pallas_src>
import functools

import jax
import jax.numpy as jnp
from jax.experimental import pallas as pl
from jax.experimental.pallas import tpu as pltpu


# ---------------------------------------------------------------------------
# Kernels
# ---------------------------------------------------------------------------

def _sdpa_dense_kernel(*refs, inv_temperature, mxu_dtype, has_attn):
    """softmax(q k^T / T) @ v with the whole key axis resident in VMEM.

    Blocks: q (BT, TQ, Dk), k (BT, Lk, Dk), v (BT, Lk, Dv).
    """
    if has_attn:
        q_ref, k_ref, v_ref, out_ref, attn_ref = refs
    else:
        q_ref, k_ref, v_ref, out_ref = refs
        attn_ref = None

    # Scale q once before the matmul (Lq*Dk multiplies instead of Lq*Lk divides)
    # and feed the MXU low-precision operands; accumulation stays f32.
    q = (q_ref[...] * jnp.asarray(inv_temperature, q_ref.dtype)).astype(mxu_dtype)
    k = k_ref[...].astype(mxu_dtype)

    # scores = q @ k^T: contract the feature dims directly (no materialized k.T).
    s = jax.lax.dot_general(
        q, k,
        dimension_numbers=(((2,), (2,)), ((0,), (0,))),
        preferred_element_type=jnp.float32,
    )  # (BT, TQ, Lk) f32

    # Numerically-stable softmax over the key axis.
    m = jnp.max(s, axis=-1, keepdims=True)
    e = jnp.exp(s - m)
    denom = jnp.sum(e, axis=-1, keepdims=True)

    v = v_ref[...].astype(mxu_dtype)
    if attn_ref is not None:
        # Exact normalization so the returned attention tracks the reference.
        p = e / denom
        attn_ref[...] = p.astype(attn_ref.dtype)
        out = jax.lax.dot_general(
            p.astype(mxu_dtype), v,
            dimension_numbers=(((2,), (1,)), ((0,), (0,))),
            preferred_element_type=jnp.float32,
        )
    else:
        # Normalize after the PV matmul: one (TQ, Dv) scale instead of a (TQ, Lk)
        # scale -> fewer VALU multiplies and one fewer live f32 temporary.
        o = jax.lax.dot_general(
            e.astype(mxu_dtype), v,
            dimension_numbers=(((2,), (1,)), ((0,), (0,))),
            preferred_element_type=jnp.float32,
        )
        out = o * pl.reciprocal(denom, approx=True)
    out_ref[...] = out.astype(out_ref.dtype)


def _sdpa_flash_kernel(q_ref, k_ref, v_ref, out_ref, m_sc, l_sc, acc_sc,
                       *, inv_temperature, mxu_dtype):
    """Online-softmax (flash) step for one (batch, q-tile, k-tile) grid point.

    Grid: (B, Lq//TQ, Lk//TK) with the key axis last and 'arbitrary'.
    """
    kv = pl.program_id(2)

    @pl.when(kv == 0)
    def _():
        m_sc[...] = jnp.full(m_sc.shape, -jnp.inf, dtype=m_sc.dtype)
        l_sc[...] = jnp.zeros(l_sc.shape, dtype=l_sc.dtype)
        acc_sc[...] = jnp.zeros(acc_sc.shape, dtype=acc_sc.dtype)

    q = (q_ref[...] * jnp.asarray(inv_temperature, q_ref.dtype)).astype(mxu_dtype)
    k = k_ref[...].astype(mxu_dtype)
    s = jax.lax.dot_general(
        q, k,
        dimension_numbers=(((2,), (2,)), ((0,), (0,))),
        preferred_element_type=jnp.float32,
    )  # (1, TQ, TK) f32

    m_prev = m_sc[...]
    m_new = jnp.maximum(m_prev, jnp.max(s, axis=-1, keepdims=True))
    alpha = jnp.exp(m_prev - m_new)
    p = jnp.exp(s - m_new)
    l_sc[...] = alpha * l_sc[...] + jnp.sum(p, axis=-1, keepdims=True)
    acc_sc[...] = alpha * acc_sc[...] + jax.lax.dot_general(
        p.astype(mxu_dtype), v_ref[...].astype(mxu_dtype),
        dimension_numbers=(((2,), (1,)), ((0,), (0,))),
        preferred_element_type=jnp.float32,
    )
    m_sc[...] = m_new

    @pl.when(kv == pl.num_programs(2) - 1)
    def _():
        out_ref[...] = (acc_sc[...] *
                        pl.reciprocal(l_sc[...], approx=True)).astype(out_ref.dtype)


# ---------------------------------------------------------------------------
# Tiling heuristics
# ---------------------------------------------------------------------------

def _tpu_vmem_budget():
    """(block-picker budget, scoped VMEM limit) derived from the actual chip."""
    cap = None
    try:
        cap = getattr(pltpu.get_tpu_info(), "vmem_capacity_bytes", None)
    except Exception:
        cap = None
    if not cap:
        cap = 64 << 20  # conservative fallback: v7x has the smallest per-TC VMEM
    limit = int(cap * 0.75)      # ~96 MiB on v5e/v6e (128 MiB), ~48 MiB on v7x (64 MiB)
    budget = int(limit * 0.80)   # headroom for compiler-internal scratch / spills
    return budget, limit


_TQ_CANDIDATES = (2048, 1024, 512, 384, 256, 128, 64, 32, 16, 8)


def _pick_dense_blocks(B, Lq, Lk, Dk, Dv, itemsize, budget, has_attn):
    """Pick (batch_block, query_tile) for the dense (full-Lk-in-VMEM) path."""

    def footprint(bt, tq):
        io = bt * (tq * Dk + Lk * Dk + Lk * Dv + tq * Dv) * itemsize
        if has_attn:
            io += bt * tq * Lk * itemsize
        scratch = bt * tq * Lk * 4 * 3   # f32 score / exp temporaries in the body
        return 2 * io + scratch          # x2: BlockSpec double-buffering

    divisors = [c for c in _TQ_CANDIDATES if Lq % c == 0]
    if footprint(1, Lq) <= budget:
        tq = Lq
    else:
        tq = None
        for c in divisors:               # biased toward MXU-filling 256/128 tiles
            if footprint(1, c) <= budget:
                tq = c
                break
        if tq is None:
            # Nothing fits: smallest multiple-of-8 divisor rather than silently
            # keeping the (guaranteed over-budget) full query axis.
            tq = divisors[-1] if divisors else Lq

    # Fold small batch elements into one step (amortizes ~0.35us/step), but keep
    # at least 2 grid steps so v7x's two TensorCores both get work.
    bt = 1
    if tq == Lq:
        fold_cap = B // 2 if (B >= 2 and Lq // tq == 1) else B
        for cand in range(fold_cap, 1, -1):
            if B % cand == 0 and cand * Lq <= 2048 and footprint(cand, tq) <= budget:
                bt = cand
                break
    return bt, tq


def _pick_flash_blocks(Lq, Lk, Dk, Dv, itemsize, budget):
    """Pick (query_tile, key_tile) for the flash (Lk-tiled) path."""

    def largest_div(L, cands):
        for c in cands:
            if L % c == 0:
                return c
        return L

    def footprint(tq, tk):
        io = (tq * Dk + tk * Dk + tk * Dv + tq * Dv) * itemsize
        scratch = tq * (2 + Dv) * 4 + 3 * tq * tk * 4
        return 2 * io + scratch

    tq = largest_div(Lq, (256, 128, 64, 32, 16, 8))
    tk = largest_div(Lk, (512, 256, 128, 64, 32, 16, 8))
    while footprint(tq, tk) > budget and tk > 8:
        smaller = [c for c in (256, 128, 64, 32, 16, 8) if c < tk and Lk % c == 0]
        if not smaller:
            break
        tk = smaller[0]
    while footprint(tq, tk) > budget and tq > 8:
        smaller = [c for c in (128, 64, 32, 16, 8) if c < tq and Lq % c == 0]
        if not smaller:
            break
        tq = smaller[0]
    return tq, tk


# ---------------------------------------------------------------------------
# Public wrapper
# ---------------------------------------------------------------------------

def scaled_dot_product_attention(q, k, v, temperature, *, return_attn=True,
                                 attn_dtype=None, mxu_dtype=jnp.bfloat16,
                                 use_flash=None):
    """Eval-mode forward of ScaledDotProductAttention; returns (output, attn, v).

    attn is None when return_attn=False (skips the dominant (B,Lq,Lk) writeback).
    attn_dtype defaults to q.dtype (note: bf16 inputs -> bf16 attention weights).
    mxu_dtype: matmul operand precision (bf16 default for MXU throughput; pass
    jnp.float32 for exact-operand matmuls).
    use_flash: force/disable the Lk-tiled online-softmax path (auto when None;
    only available with return_attn=False).
    """
    B, Lq, Dk = q.shape
    Bk, Lk, Dk2 = k.shape
    Bv, Lk2, Dv = v.shape
    assert B == Bk == Bv and Dk == Dk2 and Lk == Lk2

    itemsize = jnp.dtype(q.dtype).itemsize
    budget, vmem_limit = _tpu_vmem_budget()
    inv_temperature = 1.0 / float(temperature)

    flash = (not return_attn) and (use_flash if use_flash is not None else Lk >= 1024)

    if flash:
        tq, tk = _pick_flash_blocks(Lq, Lk, Dk, Dv, itemsize, budget)
        kernel = functools.partial(_sdpa_flash_kernel,
                                   inv_temperature=inv_temperature,
                                   mxu_dtype=mxu_dtype)
        out = pl.pallas_call(
            kernel,
            out_shape=jax.ShapeDtypeStruct((B, Lq, Dv), q.dtype),
            grid_spec=pltpu.PrefetchScalarGridSpec(
                num_scalar_prefetch=0,
                grid=(B, Lq // tq, Lk // tk),
                in_specs=[
                    pl.BlockSpec((1, tq, Dk), lambda b, i, j: (b, i, 0)),
                    pl.BlockSpec((1, tk, Dk), lambda b, i, j: (b, j, 0)),
                    pl.BlockSpec((1, tk, Dv), lambda b, i, j: (b, j, 0)),
                ],
                out_specs=pl.BlockSpec((1, tq, Dv), lambda b, i, j: (b, i, 0)),
                scratch_shapes=[
                    pltpu.VMEM((1, tq, 1), jnp.float32),    # running max m
                    pltpu.VMEM((1, tq, 1), jnp.float32),    # running sum l
                    pltpu.VMEM((1, tq, Dv), jnp.float32),   # accumulator
                ],
            ),
            compiler_params=pltpu.CompilerParams(
                dimension_semantics=("parallel", "parallel", "arbitrary"),
                vmem_limit_bytes=vmem_limit,
            ),
        )(q, k, v)
        return out, None, v

    bt, tq = _pick_dense_blocks(B, Lq, Lk, Dk, Dv, itemsize, budget, return_attn)
    grid = (B // bt, Lq // tq)
    kernel = functools.partial(_sdpa_dense_kernel,
                               inv_temperature=inv_temperature,
                               mxu_dtype=mxu_dtype,
                               has_attn=return_attn)

    out_shape = [jax.ShapeDtypeStruct((B, Lq, Dv), q.dtype)]
    out_specs = [pl.BlockSpec((bt, tq, Dv), lambda b, i: (b, i, 0))]
    if return_attn:
        if attn_dtype is None:
            attn_dtype = q.dtype
        out_shape.append(jax.ShapeDtypeStruct((B, Lq, Lk), attn_dtype))
        out_specs.append(pl.BlockSpec((bt, tq, Lk), lambda b, i: (b, i, 0)))

    results = pl.pallas_call(
        kernel,
        out_shape=tuple(out_shape),
        grid_spec=pltpu.PrefetchScalarGridSpec(
            num_scalar_prefetch=0,
            grid=grid,
            in_specs=[
                pl.BlockSpec((bt, tq, Dk), lambda b, i: (b, i, 0)),
                pl.BlockSpec((bt, Lk, Dk), lambda b, i: (b, 0, 0)),
                pl.BlockSpec((bt, Lk, Dv), lambda b, i: (b, 0, 0)),
            ],
            out_specs=tuple(out_specs),
        ),
        compiler_params=pltpu.CompilerParams(
            dimension_semantics=("parallel", "parallel"),
            vmem_limit_bytes=vmem_limit,
        ),
    )(q, k, v)

    if return_attn:
        out, attn = results
    else:
        (out,) = results
        attn = None
    return out, attn, v


# ---------------------------------------------------------------------------
# Reference + tests
# ---------------------------------------------------------------------------

def _reference(q, k, v, temperature):
    attn = jnp.einsum("bqd,bkd->bqk", q, k,
                      precision=jax.lax.Precision.HIGHEST) / temperature
    attn = jax.nn.softmax(attn, axis=2)
    out = jnp.einsum("bqk,bkd->bqd", attn, v,
                     precision=jax.lax.Precision.HIGHEST)
    return out, attn, v


if __name__ == "__main__":
    keys = jax.random.split(jax.random.PRNGKey(0), 6)

    # --- Test 1: dense path with attention returned (matches the module's API).
    B, Lq, Lk, Dk, Dv = 2, 8, 8, 32, 32
    temperature = float(Dk) ** 0.5
    q = jax.random.normal(keys[0], (B, Lq, Dk), dtype=jnp.float32)
    k = jax.random.normal(keys[1], (B, Lk, Dk), dtype=jnp.float32)
    v = jax.random.normal(keys[2], (B, Lk, Dv), dtype=jnp.float32)

    out, attn, v_out = scaled_dot_product_attention(q, k, v, temperature)
    jax.block_until_ready((out, attn, v_out))
    ref_out, ref_attn, _ = _reference(q, k, v, temperature)
    # Tolerance accounts for bf16 MXU operands (the main perf lever on TPU).
    assert jnp.allclose(out, ref_out, atol=3e-2, rtol=3e-2), "dense output mismatch"
    assert jnp.allclose(attn, ref_attn, atol=3e-2, rtol=3e-2), "dense attn mismatch"
    assert jnp.array_equal(v_out, v)

    # --- Test 2: dense path, attn writeback skipped (normalize-after-PV branch).
    out2, attn2, _ = scaled_dot_product_attention(q, k, v, temperature,
                                                  return_attn=False, use_flash=False)
    jax.block_until_ready(out2)
    assert attn2 is None
    assert jnp.allclose(out2, ref_out, atol=3e-2, rtol=3e-2), "dense(no-attn) mismatch"

    # --- Test 3: flash (Lk-tiled online-softmax) path for longer keys.
    B2, Lq2, Lk2, D2 = 2, 256, 1024, 64
    temperature2 = float(D2) ** 0.5
    q2 = jax.random.normal(keys[3], (B2, Lq2, D2), dtype=jnp.float32)
    k2 = jax.random.normal(keys[4], (B2, Lk2, D2), dtype=jnp.float32)
    v2 = jax.random.normal(keys[5], (B2, Lk2, D2), dtype=jnp.float32)
    out3, attn3, _ = scaled_dot_product_attention(q2, k2, v2, temperature2,
                                                  return_attn=False, use_flash=True)
    jax.block_until_ready(out3)
    ref_out3, _, _ = _reference(q2, k2, v2, temperature2)
    assert attn3 is None
    assert jnp.allclose(out3, ref_out3, atol=3e-2, rtol=3e-2), "flash output mismatch"

    print("KERNEL_OK")
</pallas_src>

<mosaic_0001>
module attributes {stable_mosaic.version = 11 : i64} {
  func.func @_sdpa_dense_kernel(%arg0: i32, %arg1: i32, %arg2: memref<1x8x32xf32, #tpu.memory_space<vmem>>, %arg3: memref<1x8x32xf32, #tpu.memory_space<vmem>>, %arg4: memref<1x8x32xf32, #tpu.memory_space<vmem>>, %arg5: memref<1x8x32xf32, #tpu.memory_space<vmem>>, %arg6: memref<1x8x8xf32, #tpu.memory_space<vmem>>) attributes {dimension_semantics = [#tpu.dimension_semantics<parallel>, #tpu.dimension_semantics<parallel>], iteration_bounds = array<i64: 2, 1>, scalar_prefetch = 0 : i64, scratch_operands = 0 : i64, tpu.core_type = #tpu.core_type<tc>, window_params = [{transform_indices = @transform_0, window_bounds = array<i64: 1, 8, 32>}, {transform_indices = @transform_1, window_bounds = array<i64: 1, 8, 32>}, {transform_indices = @transform_2, window_bounds = array<i64: 1, 8, 32>}, {transform_indices = @transform_3, window_bounds = array<i64: 1, 8, 32>}, {transform_indices = @transform_4, window_bounds = array<i64: 1, 8, 8>}]} {
    %c0 = arith.constant 0 : index
    %c0_0 = arith.constant 0 : index
    %c0_1 = arith.constant 0 : index
    %0 = vector.load %arg2[%c0, %c0_0, %c0_1] : memref<1x8x32xf32, #tpu.memory_space<vmem>>, vector<1x8x32xf32>
    %cst = arith.constant 0.176776692 : f32
    %1 = vector.broadcast %cst : f32 to vector<1x8x32xf32>
    %2 = arith.mulf %0, %1 : vector<1x8x32xf32>
    %3 = arith.truncf %2 : vector<1x8x32xf32> to vector<1x8x32xbf16>
    %c0_2 = arith.constant 0 : index
    %c0_3 = arith.constant 0 : index
    %c0_4 = arith.constant 0 : index
    %4 = vector.load %arg3[%c0_2, %c0_3, %c0_4] : memref<1x8x32xf32, #tpu.memory_space<vmem>>, vector<1x8x32xf32>
    %5 = arith.truncf %4 : vector<1x8x32xf32> to vector<1x8x32xbf16>
    %cst_5 = arith.constant dense<0.000000e+00> : vector<1x8x8xf32>
    %6 = tpu.matmul %3, %5, %cst_5 {dimension_numbers = #tpu.dot_dimension_numbers<[2], [2], [1], [1], [0, 0, 0, 1, 1, 1], [0], [0]>} : vector<1x8x32xbf16>, vector<1x8x32xbf16>, vector<1x8x8xf32> -> vector<1x8x8xf32>
    %cst_6 = arith.constant dense<0xFF800000> : vector<1x8xf32>
    %7 = vector.multi_reduction <maximumf>, %6, %cst_6 [2] : vector<1x8x8xf32> to vector<1x8xf32>
    %8 = vector.shape_cast %7 : vector<1x8xf32> to vector<1x8x1xf32>
    %9 = vector.broadcast %8 : vector<1x8x1xf32> to vector<1x8x8xf32>
    %10 = arith.subf %6, %9 : vector<1x8x8xf32>
    %11 = math.exp %10 : vector<1x8x8xf32>
    %cst_7 = arith.constant dense<0.000000e+00> : vector<1x8xf32>
    %12 = vector.multi_reduction <add>, %11, %cst_7 [2] : vector<1x8x8xf32> to vector<1x8xf32>
    %13 = vector.shape_cast %12 : vector<1x8xf32> to vector<1x8x1xf32>
    %c0_8 = arith.constant 0 : index
    %c0_9 = arith.constant 0 : index
    %c0_10 = arith.constant 0 : index
    %14 = vector.load %arg4[%c0_8, %c0_9, %c0_10] : memref<1x8x32xf32, #tpu.memory_space<vmem>>, vector<1x8x32xf32>
    %15 = arith.truncf %14 : vector<1x8x32xf32> to vector<1x8x32xbf16>
    %16 = vector.broadcast %13 : vector<1x8x1xf32> to vector<1x8x8xf32>
    %17 = arith.divf %11, %16 : vector<1x8x8xf32>
    %c0_11 = arith.constant 0 : index
    %c0_12 = arith.constant 0 : index
    %c0_13 = arith.constant 0 : index
    %18 = vector.load %arg6[%c0_11, %c0_12, %c0_13] : memref<1x8x8xf32, #tpu.memory_space<vmem>>, vector<1x8x8xf32>
    tpu.vector_store %arg6[%c0_11, %c0_12, %c0_13], %17 {strides = array<i32>} : memref<1x8x8xf32, #tpu.memory_space<vmem>>, vector<1x8x8xf32>,
    %19 = arith.truncf %17 : vector<1x8x8xf32> to vector<1x8x8xbf16>
    %cst_14 = arith.constant dense<0.000000e+00> : vector<1x8x32xf32>
    %20 = tpu.matmul %19, %15, %cst_14 {dimension_numbers = #tpu.dot_dimension_numbers<[2], [1], [1], [2], [0, 0, 0, 1, 1, 2], [0], [0]>} : vector<1x8x8xbf16>, vector<1x8x32xbf16>, vector<1x8x32xf32> -> vector<1x8x32xf32>
    %c0_15 = arith.constant 0 : index
    %c0_16 = arith.constant 0 : index
    %c0_17 = arith.constant 0 : index
    %21 = vector.load %arg5[%c0_15, %c0_16, %c0_17] : memref<1x8x32xf32, #tpu.memory_space<vmem>>, vector<1x8x32xf32>
    tpu.vector_store %arg5[%c0_15, %c0_16, %c0_17], %20 {strides = array<i32>} : memref<1x8x32xf32, #tpu.memory_space<vmem>>, vector<1x8x32xf32>,
    return
  }
  func.func @transform_0(%arg0: i32, %arg1: i32) -> (i32, i32, i32) {
    %c0_i32 = arith.constant 0 : i32
    %c0_i32_0 = arith.constant 0 : i32
    return %arg0, %arg1, %c0_i32 : i32, i32, i32
  }
  func.func @transform_1(%arg0: i32, %arg1: i32) -> (i32, i32, i32) {
    %c0_i32 = arith.constant 0 : i32
    %c0_i32_0 = arith.constant 0 : i32
    %c0_i32_1 = arith.constant 0 : i32
    return %arg0, %c0_i32, %c0_i32_0 : i32, i32, i32
  }
  func.func @transform_2(%arg0: i32, %arg1: i32) -> (i32, i32, i32) {
    %c0_i32 = arith.constant 0 : i32
    %c0_i32_0 = arith.constant 0 : i32
    %c0_i32_1 = arith.constant 0 : i32
    return %arg0, %c0_i32, %c0_i32_0 : i32, i32, i32
  }
  func.func @transform_3(%arg0: i32, %arg1: i32) -> (i32, i32, i32) {
    %c0_i32 = arith.constant 0 : i32
    %c0_i32_0 = arith.constant 0 : i32
    return %arg0, %arg1, %c0_i32 : i32, i32, i32
  }
  func.func @transform_4(%arg0: i32, %arg1: i32) -> (i32, i32, i32) {
    %c0_i32 = arith.constant 0 : i32
    %c0_i32_0 = arith.constant 0 : i32
    return %arg0, %arg1, %c0_i32 : i32, i32, i32
  }
}

</mosaic_0001>

<llo_original>
// kernel: tpu_custom_call.1
$region0: #{tpu_custom_call.1}
  #allocation0 [shape = 'u32[]', space=smem, size = 0x4, offset = 0x4, fixed_abs, tag = 'smem constant byte address 0x4 - core index']
  #allocation1 [shape = 'u32[144,128]{1,0:T(1,128)}', space=vmem, size = 0x12000, scoped, tag = 'internal scratch']
  %s0 = inlined_call_operand.hbm [shape: f32[2,8,32], index: 0, kind: input, shape index: {}]
  %s1 = inlined_call_operand.hbm [shape: f32[2,8,32], index: 1, kind: input, shape index: {}]
  %s2 = inlined_call_operand.hbm [shape: f32[2,8,32], index: 2, kind: input, shape index: {}]
  %s3 = inlined_call_operand.hbm [shape: f32[2,8,32], index: 3, kind: output, shape index: {0}]
  %s4 = inlined_call_operand.hbm [shape: f32[2,8,8], index: 4, kind: output, shape index: {1}]
  %5 = xla_tuple %s3, %s4
  %s6 = sld [smem:[#allocation0]]
  $region65: #{tpu_custom_call.1} parent=0
    _
  %s8 = ssub.s32 1, %s6
  %s9 = scalar_select 0, %s8, %s6
  $region1: #{tpu_custom_call.1} parent=0
    #allocation2 [shape = 'u8[8192]{0}', space=vmem, size = 0x2000, scoped, tag = 'input window, operand 0']
    #allocation3 [shape = 's32[2]{0}', space=sflag, size = 0x8, scoped, tag = 'scoped memory for tpu_custom_call.1']
    #allocation4 [shape = 's32[2]{0}', space=sflag, size = 0x8, scoped, tag = 'scoped memory for tpu_custom_call.1']
    #allocation5 [shape = 'u8[8192]{0}', space=vmem, size = 0x2000, scoped, tag = 'input window, operand 1']
    #allocation6 [shape = 's32[2]{0}', space=sflag, size = 0x8, scoped, tag = 'scoped memory for tpu_custom_call.1']
    #allocation7 [shape = 'u8[8192]{0}', space=vmem, size = 0x2000, scoped, tag = 'input window, operand 2']
    #allocation8 [shape = 'u8[8192]{0}', space=vmem, size = 0x2000, scoped, tag = 'output window, operand 0']
    #allocation9 [shape = 'u8[8192]{0}', space=vmem, size = 0x2000, scoped, tag = 'output window, operand 1']
    #allocation10 [shape = 's32[2]{0}', space=sflag, size = 0x8, scoped, tag = 'scoped memory for tpu_custom_call.1']
    %10 = vsyncpa [#allocation3], 0
    %s11 = scalar_lea.sflag [#allocation3], 1
    %12 = vsyncpa %s11, 0
    %13 = vsyncpa [#allocation6], 0
    %s14 = scalar_lea.sflag [#allocation6], 1
    %15 = vsyncpa %s14, 0
    %16 = vsyncpa [#allocation4], 0
    %s17 = scalar_lea.sflag [#allocation4], 1
    %18 = vsyncpa %s17, 0
    %19 = vsyncpa [#allocation10], 0
    %s20 = scalar_lea.sflag [#allocation10], 1
    %21 = vsyncpa %s20, 0
    loop: start=0, step=1, limit=4
    $region2: #{tpu_custom_call.1} parent=1 // loop_pre_header
      _
    $region3: #{tpu_custom_call.1} parent=1 // loop_header
      %s23 = sphi 0, %s27
      %p24 = scmp.ge.s32.totalorder %s23, 4
      %s30 = sphi 0, %s42
      %s31 = sphi 0, %s38
      %s32 = sphi 0, %s30
      %s33 = sphi 0, %s31
      %s34 = sphi 0, %s32
      %s35 = sphi 0, %s33
      %s47 = sphi 0, %s49
      %s50 = sphi 0, %s47
      %s51 = sphi 0, %s50
      %s67 = sphi 0, %s51
      %s73 = sphi 0, %s75
      %s76 = sphi 0, %s73
      %s77 = sphi 0, %s76
      %s93 = sphi 0, %s77
      %s99 = sphi 0, %s101
      %s102 = sphi 0, %s99
      %s103 = sphi 0, %s102
      %s119 = sphi 0, %s103
      %s127 = sphi 0, %s129
      %s130 = sphi 0, %s127
      %s131 = sphi 0, %s130
      %s147 = sphi 0, %s131
      %s155 = sphi 0, %s157
      %s158 = sphi 0, %s155
      %s159 = sphi 0, %s158
      %s175 = sphi 0, %s159
    $region4: #{tpu_custom_call.1} parent=1 // loop_header_branch
      %26 = sbr.rel (%p24) target = $region8
    $region5: #{tpu_custom_call.1} parent=1 // loop_body
      %s28 = ssub.s32 %s23, 1
      %s29 = ssub.s32 %s23, 2
      %s36 = sadd.s32 1, %s31
      %p37 = scmp.ge.s32.totalorder %s36, 1
      %s38 = scalar_select %p37, 0, %s36
      %s39 = sadd.s32 1, %s30
      %s40 = scalar_select %p37, %s39, %s30
      %p41 = scmp.ge.s32.totalorder %s40, 2
      %s42 = scalar_select %p41, 0, %s40
      %s43 = ssub.s32 %s30, %s42
      %s44 = ssub.s32 %s31, %s38
      %s45 = sor.u32 %s43, %s44
      %p46 = scmp.eq.s32.totalorder %s45, 0
      %s48 = sadd.s32 %s47, 1
      %s49 = scalar_select %p46, %s47, %s48
      %p52 = pneg %p46
      %p53 = scmp.eq.s32.totalorder %s23, 1
      %p54 = por %p52, %p53
      %p55 = scmp.ne.s32.totalorder %s47, %s50
      %p56 = scmp.eq.s32.totalorder %s23, 0
      %p57 = por %p55, %p56
      %p58 = scmp.ne.s32.totalorder %s47, %s50
      %p59 = scmp.eq.s32.totalorder %s28, 1
      %p60 = por %p58, %p59
      %p61 = scmp.ne.s32.totalorder %s50, %s51
      %p62 = scmp.eq.s32.totalorder %s28, 0
      %p63 = por %p61, %p62
      %p64 = scmp.ne.s32.totalorder %s50, %s51
      %p65 = scmp.eq.s32.totalorder %s29, 1
      %p66 = por %p64, %p65
      %p68 = scmp.ne.s32.totalorder %s51, %s67
      %p69 = scmp.eq.s32.totalorder %s29, 0
      %p70 = por %p68, %p69
      %s71 = ssub.s32 %s30, %s42
      %p72 = scmp.eq.s32.totalorder %s71, 0
      %s74 = sadd.s32 %s73, 1
      %s75 = scalar_select %p72, %s73, %s74
      %p78 = pneg %p72
      %p79 = scmp.eq.s32.totalorder %s23, 1
      %p80 = por %p78, %p79
      %p81 = scmp.ne.s32.totalorder %s73, %s76
      %p82 = scmp.eq.s32.totalorder %s23, 0
      %p83 = por %p81, %p82
      %p84 = scmp.ne.s32.totalorder %s73, %s76
      %p85 = scmp.eq.s32.totalorder %s28, 1
      %p86 = por %p84, %p85
      %p87 = scmp.ne.s32.totalorder %s76, %s77
      %p88 = scmp.eq.s32.totalorder %s28, 0
      %p89 = por %p87, %p88
      %p90 = scmp.ne.s32.totalorder %s76, %s77
      %p91 = scmp.eq.s32.totalorder %s29, 1
      %p92 = por %p90, %p91
      %p94 = scmp.ne.s32.totalorder %s77, %s93
      %p95 = scmp.eq.s32.totalorder %s29, 0
      %p96 = por %p94, %p95
      %s97 = ssub.s32 %s30, %s42
      %p98 = scmp.eq.s32.totalorder %s97, 0
      %s100 = sadd.s32 %s99, 1
      %s101 = scalar_select %p98, %s99, %s100
      %p104 = pneg %p98
      %p105 = scmp.eq.s32.totalorder %s23, 1
      %p106 = por %p104, %p105
      %p107 = scmp.ne.s32.totalorder %s99, %s102
      %p108 = scmp.eq.s32.totalorder %s23, 0
      %p109 = por %p107, %p108
      %p110 = scmp.ne.s32.totalorder %s99, %s102
      %p111 = scmp.eq.s32.totalorder %s28, 1
      %p112 = por %p110, %p111
      %p113 = scmp.ne.s32.totalorder %s102, %s103
      %p114 = scmp.eq.s32.totalorder %s28, 0
      %p115 = por %p113, %p114
      %p116 = scmp.ne.s32.totalorder %s102, %s103
      %p117 = scmp.eq.s32.totalorder %s29, 1
      %p118 = por %p116, %p117
      %p120 = scmp.ne.s32.totalorder %s103, %s119
      %p121 = scmp.eq.s32.totalorder %s29, 0
      %p122 = por %p120, %p121
      %s123 = ssub.s32 %s30, %s42
      %s124 = ssub.s32 %s31, %s38
      %s125 = sor.u32 %s123, %s124
      %p126 = scmp.eq.s32.totalorder %s125, 0
      %s128 = sadd.s32 %s127, 1
      %s129 = scalar_select %p126, %s127, %s128
      %p132 = pneg %p126
      %p133 = scmp.eq.s32.totalorder %s23, 1
      %p134 = por %p132, %p133
      %p135 = scmp.ne.s32.totalorder %s127, %s130
      %p136 = scmp.eq.s32.totalorder %s23, 0
      %p137 = por %p135, %p136
      %p138 = scmp.ne.s32.totalorder %s127, %s130
      %p139 = scmp.eq.s32.totalorder %s28, 1
      %p140 = por %p138, %p139
      %p141 = scmp.ne.s32.totalorder %s130, %s131
      %p142 = scmp.eq.s32.totalorder %s28, 0
      %p143 = por %p141, %p142
      %p144 = scmp.ne.s32.totalorder %s130, %s131
      %p145 = scmp.eq.s32.totalorder %s29, 1
      %p146 = por %p144, %p145
      %p148 = scmp.ne.s32.totalorder %s131, %s147
      %p149 = scmp.eq.s32.totalorder %s29, 0
      %p150 = por %p148, %p149
      %s151 = ssub.s32 %s30, %s42
      %s152 = ssub.s32 %s31, %s38
      %s153 = sor.u32 %s151, %s152
      %p154 = scmp.eq.s32.totalorder %s153, 0
      %s156 = sadd.s32 %s155, 1
      %s157 = scalar_select %p154, %s155, %s156
      %p160 = pneg %p154
      %p161 = scmp.eq.s32.totalorder %s23, 1
      %p162 = por %p160, %p161
      %p163 = scmp.ne.s32.totalorder %s155, %s158
      %p164 = scmp.eq.s32.totalorder %s23, 0
      %p165 = por %p163, %p164
      %p166 = scmp.ne.s32.totalorder %s155, %s158
      %p167 = scmp.eq.s32.totalorder %s28, 1
      %p168 = por %p166, %p167
      %p169 = scmp.ne.s32.totalorder %s158, %s159
      %p170 = scmp.eq.s32.totalorder %s28, 0
      %p171 = por %p169, %p170
      %p172 = scmp.ne.s32.totalorder %s158, %s159
      %p173 = scmp.eq.s32.totalorder %s29, 1
      %p174 = por %p172, %p173
      %p176 = scmp.ne.s32.totalorder %s159, %s175
      %p177 = scmp.eq.s32.totalorder %s29, 0
      %p178 = por %p176, %p177
      %p179 = scmp.le.s32.totalorder 1, %s23
      %p180 = scmp.lt.s32.totalorder %s23, 3
      %p181 = pnand %p179, %p180
      %p182 = pneg %p181
      // Predicated region
      $region9: #{tpu_custom_call.1} parent=5 // pred_check
        _
      $region10: #{tpu_custom_call.1} parent=5 // pred_check_branch
        %184 = sbr.rel (%p181) target = $region12
      $region11: #{tpu_custom_call.1} parent=5 // pred_region
        %s185 = ssub.s32 %s23, 1
      $region12: #{tpu_custom_call.1} parent=5 // pred_fallthru
        _
      %p186 = scmp.lt.s32.totalorder %s23, 2
      // Predicated region
      $region13: #{tpu_custom_call.1} parent=5 // pred_check
        %p187 = pneg %p186
      $region14: #{tpu_custom_call.1} parent=5 // pred_check_branch
        %189 = sbr.rel (%p187) target = $region16
      $region15: #{tpu_custom_call.1} parent=5 // pred_region
        // Predicated region
        $region17: #{tpu_custom_call.1} parent=15 // pred_check
          %p190 = pneg %p57
        $region18: #{tpu_custom_call.1} parent=15 // pred_check_branch
          %192 = sbr.rel (%p190) target = $region20
        $region19: #{tpu_custom_call.1} parent=15 // pred_region
          %s193 = sand.u32 %s47, 1
          %s194 = scalar_lea.sflag [#allocation3], %s193
          %s195 = sand.u32 %s47, 1
          %s196 = smul.addr %s195, 8
          %s197 = scalar_lea.vmem [#allocation2], %s196
          %s199 = ssub.s32 128, 128
          %200 = vsyncadd %s194, %s199
          %s201 = sadd.s32 %s31, %s30
          %s202 = smul.addr %s201, 128
          %s203 = scalar_lea.hbm %s0, %s202
          %s205 = sshll.u32 %s197, 4
          %s206 = int_to_ptr.vmem [resolvable:$true] %s205
          %208 = dma.hbm_to_vmem [thread:$0]  %s203, 128, %s206, %s194
        $region20: #{tpu_custom_call.1} parent=15 // pred_fallthru
          _
        // Predicated region
        $region21: #{tpu_custom_call.1} parent=15 // pred_check
          %p209 = pneg %p83
        $region22: #{tpu_custom_call.1} parent=15 // pred_check_branch
          %211 = sbr.rel (%p209) target = $region24
        $region23: #{tpu_custom_call.1} parent=15 // pred_region
          %s212 = sand.u32 %s23, 1
          %s213 = scalar_lea.sflag [#allocation6], %s212
          %s214 = sand.u32 %s73, 1
          %s215 = smul.addr %s214, 8
          %s216 = scalar_lea.vmem [#allocation5], %s215
          %s218 = ssub.s32 128, 128
          %219 = vsyncadd %s213, %s218
          %s220 = smul.addr %s30, 128
          %s221 = scalar_lea.hbm %s1, %s220
          %s223 = sshll.u32 %s216, 4
          %s224 = int_to_ptr.vmem [resolvable:$true] %s223
          %226 = dma.hbm_to_vmem [thread:$0]  %s221, 128, %s224, %s213
        $region24: #{tpu_custom_call.1} parent=15 // pred_fallthru
          _
        // Predicated region
        $region25: #{tpu_custom_call.1} parent=15 // pred_check
          %p227 = pneg %p109
        $region26: #{tpu_custom_call.1} parent=15 // pred_check_branch
          %229 = sbr.rel (%p227) target = $region28
        $region27: #{tpu_custom_call.1} parent=15 // pred_region
          %s230 = sand.u32 %s23, 1
          %s231 = scalar_lea.sflag [#allocation6], %s230
          %s232 = sand.u32 %s99, 1
          %s233 = smul.addr %s232, 8
          %s234 = scalar_lea.vmem [#allocation7], %s233
          %s236 = ssub.s32 128, 128
          %237 = vsyncadd %s231, %s236
          %s238 = smul.addr %s30, 128
          %s239 = scalar_lea.hbm %s2, %s238
          %s241 = sshll.u32 %s234, 4
          %s242 = int_to_ptr.vmem [resolvable:$true] %s241
          %244 = dma.hbm_to_vmem [thread:$0]  %s239, 128, %s242, %s231
        $region28: #{tpu_custom_call.1} parent=15 // pred_fallthru
          _
      $region16: #{tpu_custom_call.1} parent=5 // pred_fallthru
        _
      %p245 = scmp.le.s32.totalorder 1, %s23
      %p246 = scmp.lt.s32.totalorder %s23, 3
      %p247 = pnand %p245, %p246
      %p248 = pneg %p247
      // Predicated region
      $region29: #{tpu_custom_call.1} parent=5 // pred_check
        _
      $region30: #{tpu_custom_call.1} parent=5 // pred_check_branch
        %250 = sbr.rel (%p247) target = $region32
      $region31: #{tpu_custom_call.1} parent=5 // pred_region
        %s251 = ssub.s32 %s23, 1
        %s252 = sand.u32 %s50, 1
        %s253 = scalar_lea.sflag [#allocation3], %s252
        %s254 = sand.u32 %s50, 1
        %s255 = smul.addr %s254, 8
        %s256 = scalar_lea.vmem [#allocation2], %s255
        // Predicated region
        $region33: #{tpu_custom_call.1} parent=31 // pred_check
          %p257 = pneg %p63
        $region34: #{tpu_custom_call.1} parent=31 // pred_check_branch
          %259 = sbr.rel (%p257) target = $region36
        $region35: #{tpu_custom_call.1} parent=31 // pred_region
          %260 = dma.done %s253, 128
        $region36: #{tpu_custom_call.1} parent=31 // pred_fallthru
          _
        %s261 = sand.u32 %s28, 1
        %s262 = scalar_lea.sflag [#allocation6], %s261
        %s263 = sand.u32 %s76, 1
        %s264 = smul.addr %s263, 8
        %s265 = scalar_lea.vmem [#allocation5], %s264
        // Predicated region
        $region37: #{tpu_custom_call.1} parent=31 // pred_check
          %p266 = pneg %p89
        $region38: #{tpu_custom_call.1} parent=31 // pred_check_branch
          %268 = sbr.rel (%p266) target = $region40
        $region39: #{tpu_custom_call.1} parent=31 // pred_region
          %269 = dma.done %s262, 128
        $region40: #{tpu_custom_call.1} parent=31 // pred_fallthru
          _
        %s270 = sand.u32 %s28, 1
        %s271 = scalar_lea.sflag [#allocation6], %s270
        %s272 = sand.u32 %s102, 1
        %s273 = smul.addr %s272, 8
        %s274 = scalar_lea.vmem [#allocation7], %s273
        // Predicated region
        $region41: #{tpu_custom_call.1} parent=31 // pred_check
          %p275 = pneg %p115
        $region42: #{tpu_custom_call.1} parent=31 // pred_check_branch
          %277 = sbr.rel (%p275) target = $region44
        $region43: #{tpu_custom_call.1} parent=31 // pred_region
          %278 = dma.done %s271, 128
        $region44: #{tpu_custom_call.1} parent=31 // pred_fallthru
          _
        %s279 = sand.u32 %s50, 1
        %s280 = scalar_lea.sflag [#allocation3], %s279
        %s281 = sand.u32 %s50, 1
        %s282 = smul.addr %s281, 8
        %s283 = scalar_lea.vmem [#allocation2], %s282
        %p284 = pneg %p63
        %p285 = pneg %p60
        %s286 = sand.u32 %s28, 1
        %s287 = scalar_lea.sflag [#allocation6], %s286
        %s288 = sand.u32 %s76, 1
        %s289 = smul.addr %s288, 8
        %s290 = scalar_lea.vmem [#allocation5], %s289
        %p291 = pneg %p89
        %p292 = pneg %p86
        %s293 = sand.u32 %s28, 1
        %s294 = scalar_lea.sflag [#allocation6], %s293
        %s295 = sand.u32 %s102, 1
        %s296 = smul.addr %s295, 8
        %s297 = scalar_lea.vmem [#allocation7], %s296
        %p298 = pneg %p115
        %p299 = pneg %p112
        %p300 = pneg %p143
        %p301 = pneg %p140
        %s302 = sand.u32 %s130, 1
        %s303 = scalar_lea.sflag [#allocation4], %s302
        %s304 = sand.u32 %s130, 1
        %s305 = smul.addr %s304, 8
        %s306 = scalar_lea.vmem [#allocation8], %s305
        %p307 = pneg %p171
        %p308 = pneg %p168
        %s309 = sand.u32 %s158, 1
        %s310 = scalar_lea.sflag [#allocation10], %s309
        %s311 = sand.u32 %s158, 1
        %s312 = smul.addr %s311, 8
        %s313 = scalar_lea.vmem [#allocation9], %s312
        %v315 = vld [vmem:[%s256] sm:$0xff]
        %v316 = vmul.f32 %v315, 0.17677669
        %v317 = vpack.c.bf16 %v316, %v316
        %v318 = vld [vmem:[%s265] sm:$0xff]
        %v319 = vpack.c.bf16 %v318, %v318
        %vm320 = vcmask 261120
        %v322 = vsel %vm320, %v317, 0
        %v325 = vsel %vm320, %v319, 0
        %327 = vmatprep.subr.bf16.mxu0 0
        %328 = vmatpush1.bf16.xpose.msra.mxu0 %v325
        %329 = vmatprep.subr.bf16.mxu0 0
        %330 = vmatpush1.bf16.xpose.msra.mxu0 0
        %331 = vmatprep.subr.bf16.mxu0 0
        %332 = vmatpush1.bf16.xpose.msra.mxu0 0
        %333 = vmatprep.subr.bf16.mxu0 0
        %334 = vmatpush1.bf16.xpose.msra.mxu0 0
        %335 = vmatprep.subr.bf16.mxu0 0
        %336 = vmatpush1.bf16.xpose.msra.mxu0 0
        %337 = vmatprep.subr.bf16.mxu0 0
        %338 = vmatpush1.bf16.xpose.msra.mxu0 0
        %339 = vmatprep.subr.bf16.mxu0 0
        %340 = vmatpush1.bf16.xpose.msra.mxu0 0
        %341 = vmatprep.subr.bf16.mxu0 0
        %342 = vmatpush1.bf16.xpose.msra.mxu0 0
        %343 = vmatprep.subr.bf16.mxu0 0
        %344 = vmatpush1.bf16.xpose.msra.mxu0 0
        %345 = vmatprep.subr.bf16.mxu0 0
        %346 = vmatpush1.bf16.xpose.msra.mxu0 0
        %347 = vmatprep.subr.bf16.mxu0 0
        %348 = vmatpush1.bf16.xpose.msra.mxu0 0
        %349 = vmatprep.subr.bf16.mxu0 0
        %350 = vmatpush1.bf16.xpose.msra.mxu0 0
        %351 = vmatprep.subr.bf16.mxu0 0
        %352 = vmatpush1.bf16.xpose.msra.mxu0 0
        %353 = vmatprep.subr.bf16.mxu0 0
        %354 = vmatpush1.bf16.xpose.msra.mxu0 0
        %355 = vmatprep.subr.bf16.mxu0 0
        %356 = vmatpush1.bf16.xpose.msra.mxu0 0
        %357 = vmatprep.subr.bf16.mxu0 0
        %358 = vmatpush1.bf16.xpose.msra.mxu0 0
        %359 = vmatprep.mubr.bf16.mxu0 0
        %360 = vmatmul.mubr.bf16.gmra.mrb[0].mxu0 %v322
        %v361 = vpop.f32.mrb[0].mxu0
        %v362 = vadd.f32 0.0, %v361
        %v363 = vpop.f32.mrb[0].mxu0
        %v364 = vpop.f32.mrb[0].mxu0
        %v365 = vpop.f32.mrb[0].mxu0
        %366 = vdwg.mxu0
        %vm367 = vcmask 64512
        %v368 = vsel %vm367, %v362, -inf
        %369 = vmax.xlane.f32.xlu0 %v368
        %v370 = vpop.xlane.xlu0 %369
        %v371 = vsub.f32 %v362, %v370
        %v372 = vmul.f32 %v371, 1.442695
        %v373 = vpow.pop %v372
        %v374 = vsel %vm367, %v373, 0.0
        %375 = vadd.xlane.f32.xlu0 %v374
        %v376 = vpop.xlane.xlu0 %375
        %v377 = vld [vmem:[%s274] sm:$0xff]
        %v378 = vpack.c.bf16 %v377, %v377
        %v379 = vrcp.pop %v376
        %v380 = vmul.f32 %v373, %v379
        %381 = vst.msk [vmem:[%s313] sm:$0xff] %vm367, %v380
        %v382 = vpack.c.bf16 %v380, %v380
        %v384 = vsel %vm367, %v382, 0
        %vm386 = vcmask 1043456
        %v388 = vsel %vm386, %v378, 0
        %390 = vmatprep.subr.bf16.mxu0 0
        %391 = vmatpush1.bf16.msra.mxu0 %v388
        %392 = vmatprep.subr.bf16.mxu0 0
        %393 = vmatpush1.bf16.msra.mxu0 0
        %394 = vmatprep.subr.bf16.mxu0 0
        %395 = vmatpush1.bf16.msra.mxu0 0
        %396 = vmatprep.subr.bf16.mxu0 0
        %397 = vmatpush1.bf16.msra.mxu0 0
        %398 = vmatprep.subr.bf16.mxu0 0
        %399 = vmatpush1.bf16.msra.mxu0 0
        %400 = vmatprep.subr.bf16.mxu0 0
        %401 = vmatpush1.bf16.msra.mxu0 0
        %402 = vmatprep.subr.bf16.mxu0 0
        %403 = vmatpush1.bf16.msra.mxu0 0
        %404 = vmatprep.subr.bf16.mxu0 0
        %405 = vmatpush1.bf16.msra.mxu0 0
        %406 = vmatprep.subr.bf16.mxu0 0
        %407 = vmatpush1.bf16.msra.mxu0 0
        %408 = vmatprep.subr.bf16.mxu0 0
        %409 = vmatpush1.bf16.msra.mxu0 0
        %410 = vmatprep.subr.bf16.mxu0 0
        %411 = vmatpush1.bf16.msra.mxu0 0
        %412 = vmatprep.subr.bf16.mxu0 0
        %413 = vmatpush1.bf16.msra.mxu0 0
        %414 = vmatprep.subr.bf16.mxu0 0
        %415 = vmatpush1.bf16.msra.mxu0 0
        %416 = vmatprep.subr.bf16.mxu0 0
        %417 = vmatpush1.bf16.msra.mxu0 0
        %418 = vmatprep.subr.bf16.mxu0 0
        %419 = vmatpush1.bf16.msra.mxu0 0
        %420 = vmatprep.subr.bf16.mxu0 0
        %421 = vmatpush1.bf16.msra.mxu0 0
        %422 = vmatprep.mubr.bf16.mxu0 0
        %423 = vmatmul.mubr.bf16.gmra.mrb[0].mxu0 %v384
        %v424 = vpop.f32.mrb[0].mxu0
        %v425 = vadd.f32 0.0, %v424
        %v426 = vpop.f32.mrb[0].mxu0
        %v427 = vpop.f32.mrb[0].mxu0
        %v428 = vpop.f32.mrb[0].mxu0
        %429 = vdwg.mxu0
        %430 = vst.msk [vmem:[%s306] sm:$0xff] %vm320, %v425
        %s431 = sand.u32 %s130, 1
        %s432 = scalar_lea.sflag [#allocation4], %s431
        %s433 = sand.u32 %s130, 1
        %s434 = smul.addr %s433, 8
        %s435 = scalar_lea.vmem [#allocation8], %s434
        %s436 = sand.u32 %s158, 1
        %s437 = scalar_lea.sflag [#allocation10], %s436
        %s438 = sand.u32 %s158, 1
        %s439 = smul.addr %s438, 8
        %s440 = scalar_lea.vmem [#allocation9], %s439
        // Predicated region
        $region45: #{tpu_custom_call.1} parent=31 // pred_check
          %p441 = pneg %p140
        $region46: #{tpu_custom_call.1} parent=31 // pred_check_branch
          %443 = sbr.rel (%p441) target = $region48
        $region47: #{tpu_custom_call.1} parent=31 // pred_region
          %s445 = ssub.s32 128, 128
          %446 = vsyncadd %s432, %s445
          %s447 = sadd.s32 %s33, %s32
          %s448 = smul.addr %s447, 128
          %s449 = scalar_lea.hbm %s3, %s448
          %s451 = sshll.u32 %s435, 4
          %s452 = int_to_ptr.vmem [resolvable:$true] %s451
          %454 = dma.vmem_to_hbm [thread:$0]  %s452, 128, %s449, %s432
        $region48: #{tpu_custom_call.1} parent=31 // pred_fallthru
          _
        // Predicated region
        $region49: #{tpu_custom_call.1} parent=31 // pred_check
          %p455 = pneg %p168
        $region50: #{tpu_custom_call.1} parent=31 // pred_check_branch
          %457 = sbr.rel (%p455) target = $region52
        $region51: #{tpu_custom_call.1} parent=31 // pred_region
          %s459 = ssub.s32 128, 128
          %460 = vsyncadd %s437, %s459
          %s461 = sadd.s32 %s33, %s32
          %s462 = smul.addr %s461, 128
          %s463 = scalar_lea.hbm %s4, %s462
          %s465 = sshll.u32 %s440, 4
          %s466 = int_to_ptr.vmem [resolvable:$true] %s465
          %468 = dma.vmem_to_hbm [thread:$0]  %s466, 128, %s463, %s437
        $region52: #{tpu_custom_call.1} parent=31 // pred_fallthru
          _
      $region32: #{tpu_custom_call.1} parent=5 // pred_fallthru
        _
      %p469 = scmp.le.s32.totalorder 2, %s23
      // Predicated region
      $region53: #{tpu_custom_call.1} parent=5 // pred_check
        %p470 = pneg %p469
      $region54: #{tpu_custom_call.1} parent=5 // pred_check_branch
        %472 = sbr.rel (%p470) target = $region56
      $region55: #{tpu_custom_call.1} parent=5 // pred_region
        %s473 = ssub.s32 %s23, 2
        // Predicated region
        $region57: #{tpu_custom_call.1} parent=55 // pred_check
          %p474 = pneg %p146
        $region58: #{tpu_custom_call.1} parent=55 // pred_check_branch
          %476 = sbr.rel (%p474) target = $region60
        $region59: #{tpu_custom_call.1} parent=55 // pred_region
          %s477 = sand.u32 %s131, 1
          %s478 = scalar_lea.sflag [#allocation4], %s477
          %s479 = sand.u32 %s131, 1
          %s480 = smul.addr %s479, 8
          %s481 = scalar_lea.vmem [#allocation8], %s480
          %482 = dma.done %s478, 128
        $region60: #{tpu_custom_call.1} parent=55 // pred_fallthru
          _
        // Predicated region
        $region61: #{tpu_custom_call.1} parent=55 // pred_check
          %p483 = pneg %p174
        $region62: #{tpu_custom_call.1} parent=55 // pred_check_branch
          %485 = sbr.rel (%p483) target = $region64
        $region63: #{tpu_custom_call.1} parent=55 // pred_region
          %s486 = sand.u32 %s159, 1
          %s487 = scalar_lea.sflag [#allocation10], %s486
          %s488 = sand.u32 %s159, 1
          %s489 = smul.addr %s488, 8
          %s490 = scalar_lea.vmem [#allocation9], %s489
          %491 = dma.done %s487, 128
        $region64: #{tpu_custom_call.1} parent=55 // pred_fallthru
          _
      $region56: #{tpu_custom_call.1} parent=5 // pred_fallthru
        _
    $region6: #{tpu_custom_call.1} parent=1 // loop_footer
      %s27 = sadd.s32 1, %s23
    $region7: #{tpu_custom_call.1} parent=1 // loop_footer_branch
      %22 = sbr.rel target = $region3
    $region8: #{tpu_custom_call.1} parent=1 // loop_exit
      _
    %492 = vsyncpa [#allocation3], 1
    %s493 = scalar_lea.sflag [#allocation3], 1
    %494 = vsyncpa %s493, 1
    %495 = vsyncpa [#allocation6], 1
    %s496 = scalar_lea.sflag [#allocation6], 1
    %497 = vsyncpa %s496, 1
    %498 = vsyncpa [#allocation4], 1
    %s499 = scalar_lea.sflag [#allocation4], 1
    %500 = vsyncpa %s499, 1
    %501 = vsyncpa [#allocation10], 1
    %s502 = scalar_lea.sflag [#allocation10], 1
    %503 = vsyncpa %s502, 1

</llo_original>
